<compile_context>
chip_gen: v7x
topology: tpu7x:2x2x1
jax: 0.10.0
libtpu: 0.0.40
codegen_flags: <defaults>
</compile_context>

<pallas_src>
import jax
import jax.numpy as jnp
from jax.experimental import pallas as pl
from jax.experimental.pallas import tpu as pltpu


# ---------------------------------------------------------------------------
# Kernel 1: fused im2col-matmul conv1 + BatchNorm (eval) + ReLU
# ---------------------------------------------------------------------------
def conv_bn_relu_kernel(p_ref, w_ref, scale_ref, shift_ref, o_ref):
    # p_ref:     (TM, KPAD)    row tile of im2col patches
    # w_ref:     (KPAD, CPAD)  conv weight as matmul matrix (resident across grid)
    # scale_ref: (1, CPAD)     gamma / sqrt(running_var + eps)
    # shift_ref: (1, CPAD)     beta - running_mean * scale
    acc = jnp.dot(p_ref[...], w_ref[...], preferred_element_type=jnp.float32)
    y = acc * scale_ref[...] + shift_ref[...]
    o_ref[...] = jnp.maximum(y, 0.0).astype(o_ref.dtype)


# ---------------------------------------------------------------------------
# Kernel 2: MaxPool2d(kernel=3, stride=2, padding=1), NHWC, one image per step
# ---------------------------------------------------------------------------
def maxpool_kernel(ye_ref, yo_ref, o_ref):
    # ye_ref: (Ho+2, Wo//2+1, C)  even-column taps of the zero-padded feature map
    # yo_ref: (Ho+2, Wo//2+1, C)  odd-column taps
    # o_ref : (Hp, Wp, C)
    hp, wp, c = o_ref.shape
    ye = ye_ref[...]
    yo = yo_ref[...]
    # --- pool along W: taps (2j, 2j+1, 2j+2) == (ye[j], yo[j], ye[j+1]) ---
    col = jnp.maximum(jnp.maximum(ye[:, :wp, :], yo[:, :wp, :]), ye[:, 1:wp + 1, :])
    # --- pool along H: taps (2i, 2i+1, 2i+2) via leading-dim reshapes (layout
    #     preserving: the (sublane, lane) dims are untouched) ---
    pair = col[: 2 * hp].reshape(hp, 2, wp, c)               # rows 2i and 2i+1
    last = col[2: 2 * hp + 2].reshape(hp, 2, wp, c)[:, 0]    # rows 2i+2
    out = jnp.maximum(jnp.maximum(pair[:, 0], pair[:, 1]), last)
    o_ref[...] = out.astype(o_ref.dtype)


# ---------------------------------------------------------------------------
# Wrapper
# ---------------------------------------------------------------------------
def _round_up(n, m):
    return ((n + m - 1) // m) * m


def _im2col(x_nhwc, kh, kw, stride, pad):
    b, h, w, cin = x_nhwc.shape
    ho = (h + 2 * pad - kh) // stride + 1
    wo = (w + 2 * pad - kw) // stride + 1
    xp = jnp.pad(x_nhwc, ((0, 0), (pad, pad), (pad, pad), (0, 0)))
    cols = []
    for ih in range(kh):
        for iw in range(kw):
            cols.append(xp[:, ih:ih + stride * ho:stride,
                           iw:iw + stride * wo:stride, :])
    patches = jnp.concatenate(cols, axis=-1)       # (B, Ho, Wo, kh*kw*Cin)
    return patches.reshape(b * ho * wo, kh * kw * cin), ho, wo


def visible_stem_forward(x_nchw, conv_w, gamma, beta, run_mean, run_var,
                         eps=1e-5, row_tile=None):
    """conv1 -> bn1 (eval) -> relu -> maxpool, matching visible_module.forward.

    x_nchw: (B, 3, H, W);  conv_w: (64, 3, 7, 7);  BN params: (64,)
    returns (B, 64, H//4, W//4) in NCHW.
    """
    b, _, _, _ = x_nchw.shape
    cout, _, kh, kw = conv_w.shape

    # ---- im2col (XLA data movement; the compute runs in the Pallas kernel) ----
    x_nhwc = jnp.transpose(x_nchw, (0, 2, 3, 1))
    patches, ho, wo = _im2col(x_nhwc, kh, kw, stride=2, pad=3)
    rows, k = patches.shape

    # ---- lane-dense padding (avoid masked loads/stores) ----
    if row_tile is None:
        # big tiles amortise the per-grid-step overhead; small tiles keep >=2
        # grid steps at toy sizes so the "parallel" axis can still split cores.
        row_tile = 512 if rows >= 4096 else 256
    kpad = _round_up(k, 128)            # 147 -> 256
    cpad = _round_up(cout, 128)         # 64  -> 128
    rows_pad = _round_up(rows, row_tile)

    patches_p = jnp.pad(patches.astype(jnp.float32),
                        ((0, rows_pad - rows), (0, kpad - k)))

    # conv weight as (k, cout) matmul matrix, row order = (kh, kw, cin)
    w_mat = jnp.transpose(conv_w, (2, 3, 1, 0)).reshape(k, cout)
    scale = gamma / jnp.sqrt(run_var + eps)
    shift = beta - run_mean * scale
    w_p = jnp.zeros((kpad, cpad), jnp.float32).at[:k, :cout].set(w_mat)
    scale_p = jnp.zeros((1, cpad), jnp.float32).at[0, :cout].set(scale)
    shift_p = jnp.zeros((1, cpad), jnp.float32).at[0, :cout].set(shift)

    grid = (rows_pad // row_tile,)
    conv_cost = pl.CostEstimate(
        flops=2 * rows_pad * kpad * cpad,
        transcendentals=0,
        bytes_accessed=4 * (rows_pad * kpad + kpad * cpad + rows_pad * cpad))
    y = pl.pallas_call(
        conv_bn_relu_kernel,
        out_shape=jax.ShapeDtypeStruct((rows_pad, cpad), jnp.float32),
        grid_spec=pltpu.PrefetchScalarGridSpec(
            num_scalar_prefetch=0,
            grid=grid,
            in_specs=[
                pl.BlockSpec((row_tile, kpad), lambda i: (i, 0)),   # patches
                pl.BlockSpec((kpad, cpad), lambda i: (0, 0)),       # weights (resident)
                pl.BlockSpec((1, cpad), lambda i: (0, 0)),          # BN scale
                pl.BlockSpec((1, cpad), lambda i: (0, 0)),          # BN shift
            ],
            out_specs=pl.BlockSpec((row_tile, cpad), lambda i: (i, 0)),
        ),
        compiler_params=pltpu.CompilerParams(
            dimension_semantics=("parallel",)),
        cost_estimate=conv_cost,
    )(patches_p, w_p, scale_p, shift_p)

    # ---- maxpool 3x3 / stride 2 / pad 1 ----
    y = y[:rows].reshape(b, ho, wo, cpad)
    assert ho % 2 == 0 and wo % 2 == 0, "stem expects H, W divisible by 4"
    hp = (ho + 2 - 3) // 2 + 1
    wp = (wo + 2 - 3) // 2 + 1
    # zero padding == -inf padding here (post-ReLU values >= 0, every window
    # contains at least one valid element).
    y_pad = jnp.pad(y, ((0, 0), (1, 1), (1, 1), (0, 0)))
    y_even = y_pad[:, :, 0::2, :]                  # (B, Ho+2, Wo//2+1, CPAD)
    y_odd = y_pad[:, :, 1::2, :]                   # (B, Ho+2, Wo//2+1, CPAD)
    wcols = wo // 2 + 1

    pooled = pl.pallas_call(
        maxpool_kernel,
        out_shape=jax.ShapeDtypeStruct((b, hp, wp, cpad), jnp.float32),
        grid_spec=pltpu.PrefetchScalarGridSpec(
            num_scalar_prefetch=0,
            grid=(b,),
            in_specs=[
                pl.BlockSpec((None, ho + 2, wcols, cpad), lambda i: (i, 0, 0, 0)),
                pl.BlockSpec((None, ho + 2, wcols, cpad), lambda i: (i, 0, 0, 0)),
            ],
            out_specs=pl.BlockSpec((None, hp, wp, cpad), lambda i: (i, 0, 0, 0)),
        ),
        compiler_params=pltpu.CompilerParams(
            dimension_semantics=("parallel",)),
    )(y_even, y_odd)

    out = pooled[:, :, :, :cout]                   # drop lane-padding channels
    return jnp.transpose(out, (0, 3, 1, 2))        # NHWC -> NCHW


# ---------------------------------------------------------------------------
if __name__ == "__main__":
    B, CIN, H, W = 2, 3, 32, 32
    COUT, KH, KW = 64, 7, 7
    EPS = 1e-5

    key = jax.random.PRNGKey(0)
    kx, kwt, kg, kb, km, kv = jax.random.split(key, 6)

    x = jax.random.normal(kx, (B, CIN, H, W), dtype=jnp.float32)
    fan_in = CIN * KH * KW
    conv_w = jax.random.normal(kwt, (COUT, CIN, KH, KW), jnp.float32) * (2.0 / fan_in) ** 0.5
    gamma = 1.0 + 0.1 * jax.random.normal(kg, (COUT,), jnp.float32)
    beta = 0.1 * jax.random.normal(kb, (COUT,), jnp.float32)
    run_mean = 0.1 * jax.random.normal(km, (COUT,), jnp.float32)
    run_var = jax.random.uniform(kv, (COUT,), jnp.float32, minval=0.5, maxval=1.5)

    fwd = jax.jit(visible_stem_forward)
    out = jax.block_until_ready(fwd(x, conv_w, gamma, beta, run_mean, run_var))

    # ---- pure-XLA reference: conv -> eval BN -> relu -> maxpool ----
    ref = jax.lax.conv_general_dilated(
        x, conv_w, window_strides=(2, 2), padding=((3, 3), (3, 3)),
        dimension_numbers=("NCHW", "OIHW", "NCHW"))
    s = gamma / jnp.sqrt(run_var + EPS)
    ref = ref * s[None, :, None, None] + (beta - run_mean * s)[None, :, None, None]
    ref = jnp.maximum(ref, 0.0)
    ref = jax.lax.reduce_window(
        ref, -jnp.inf, jax.lax.max,
        window_dimensions=(1, 1, 3, 3), window_strides=(1, 1, 2, 2),
        padding=((0, 0), (0, 0), (1, 1), (1, 1)))

    assert out.shape == (B, COUT, H // 4, W // 4), out.shape
    max_err = float(jnp.max(jnp.abs(out - ref)))
    assert jnp.allclose(out, ref, atol=1e-3, rtol=1e-3), max_err
    print("KERNEL_OK")
</pallas_src>

<mosaic_0001>
module attributes {stable_mosaic.version = 11 : i64} {
  func.func @conv_bn_relu_kernel(%arg0: i32, %arg1: memref<256x256xf32, #tpu.memory_space<vmem>>, %arg2: memref<256x128xf32, #tpu.memory_space<vmem>>, %arg3: memref<1x128xf32, #tpu.memory_space<vmem>>, %arg4: memref<1x128xf32, #tpu.memory_space<vmem>>, %arg5: memref<256x128xf32, #tpu.memory_space<vmem>>) attributes {dimension_semantics = [#tpu.dimension_semantics<parallel>], iteration_bounds = array<i64: 2>, scalar_prefetch = 0 : i64, scratch_operands = 0 : i64, tpu.core_type = #tpu.core_type<tc>, window_params = [{transform_indices = @transform_0, window_bounds = array<i64: 256, 256>}, {pipeline_mode = #tpu.pipeline_mode<synchronous>, transform_indices = @transform_1, window_bounds = array<i64: 256, 128>}, {pipeline_mode = #tpu.pipeline_mode<synchronous>, transform_indices = @transform_2, window_bounds = array<i64: 1, 128>}, {pipeline_mode = #tpu.pipeline_mode<synchronous>, transform_indices = @transform_3, window_bounds = array<i64: 1, 128>}, {transform_indices = @transform_4, window_bounds = array<i64: 256, 128>}]} {
    %c0 = arith.constant 0 : index
    %c0_0 = arith.constant 0 : index
    %0 = vector.load %arg1[%c0, %c0_0] : memref<256x256xf32, #tpu.memory_space<vmem>>, vector<256x256xf32>
    %c0_1 = arith.constant 0 : index
    %c0_2 = arith.constant 0 : index
    %1 = vector.load %arg2[%c0_1, %c0_2] : memref<256x128xf32, #tpu.memory_space<vmem>>, vector<256x128xf32>
    %cst = arith.constant dense<0.000000e+00> : vector<256x128xf32>
    %2 = tpu.matmul %0, %1, %cst {dimension_numbers = #tpu.dot_dimension_numbers<[1], [0], [0], [1], [0, 0, 1, 1], [], []>} : vector<256x256xf32>, vector<256x128xf32>, vector<256x128xf32> -> vector<256x128xf32>
    %c0_3 = arith.constant 0 : index
    %c0_4 = arith.constant 0 : index
    %3 = vector.load %arg3[%c0_3, %c0_4] : memref<1x128xf32, #tpu.memory_space<vmem>>, vector<1x128xf32>
    %4 = vector.broadcast %3 : vector<1x128xf32> to vector<256x128xf32>
    %5 = arith.mulf %2, %4 : vector<256x128xf32>
    %c0_5 = arith.constant 0 : index
    %c0_6 = arith.constant 0 : index
    %6 = vector.load %arg4[%c0_5, %c0_6] : memref<1x128xf32, #tpu.memory_space<vmem>>, vector<1x128xf32>
    %7 = vector.broadcast %6 : vector<1x128xf32> to vector<256x128xf32>
    %8 = arith.addf %5, %7 : vector<256x128xf32>
    %cst_7 = arith.constant 0.000000e+00 : f32
    %9 = vector.broadcast %cst_7 : f32 to vector<256x128xf32>
    %10 = arith.maximumf %8, %9 : vector<256x128xf32>
    %c0_8 = arith.constant 0 : index
    %c0_9 = arith.constant 0 : index
    %11 = vector.load %arg5[%c0_8, %c0_9] : memref<256x128xf32, #tpu.memory_space<vmem>>, vector<256x128xf32>
    tpu.vector_store %arg5[%c0_8, %c0_9], %10 {strides = array<i32>} : memref<256x128xf32, #tpu.memory_space<vmem>>, vector<256x128xf32>,
    return
  }
  func.func @transform_0(%arg0: i32) -> (i32, i32) {
    %c0_i32 = arith.constant 0 : i32
    %c0_i32_0 = arith.constant 0 : i32
    return %arg0, %c0_i32 : i32, i32
  }
  func.func @transform_1(%arg0: i32) -> (i32, i32) {
    %c0_i32 = arith.constant 0 : i32
    %c0_i32_0 = arith.constant 0 : i32
    %c0_i32_1 = arith.constant 0 : i32
    return %c0_i32, %c0_i32_0 : i32, i32
  }
  func.func @transform_2(%arg0: i32) -> (i32, i32) {
    %c0_i32 = arith.constant 0 : i32
    %c0_i32_0 = arith.constant 0 : i32
    %c0_i32_1 = arith.constant 0 : i32
    return %c0_i32, %c0_i32_0 : i32, i32
  }
  func.func @transform_3(%arg0: i32) -> (i32, i32) {
    %c0_i32 = arith.constant 0 : i32
    %c0_i32_0 = arith.constant 0 : i32
    %c0_i32_1 = arith.constant 0 : i32
    return %c0_i32, %c0_i32_0 : i32, i32
  }
  func.func @transform_4(%arg0: i32) -> (i32, i32) {
    %c0_i32 = arith.constant 0 : i32
    %c0_i32_0 = arith.constant 0 : i32
    return %arg0, %c0_i32 : i32, i32
  }
}

module attributes {stable_mosaic.version = 11 : i64} {
  func.func @maxpool_kernel(%arg0: i32, %arg1: memref<1x18x9x128xf32, #tpu.memory_space<vmem>>, %arg2: memref<1x18x9x128xf32, #tpu.memory_space<vmem>>, %arg3: memref<1x8x8x128xf32, #tpu.memory_space<vmem>>) attributes {dimension_semantics = [#tpu.dimension_semantics<parallel>], iteration_bounds = array<i64: 2>, scalar_prefetch = 0 : i64, scratch_operands = 0 : i64, tpu.core_type = #tpu.core_type<tc>, window_params = [{transform_indices = @transform_0, window_bounds = array<i64: 1, 18, 9, 128>}, {transform_indices = @transform_1, window_bounds = array<i64: 1, 18, 9, 128>}, {transform_indices = @transform_2, window_bounds = array<i64: 1, 8, 8, 128>}]} {
    %c0 = arith.constant 0 : index
    %c0_0 = arith.constant 0 : index
    %c0_1 = arith.constant 0 : index
    %c0_2 = arith.constant 0 : index
    %0 = vector.load %arg1[%c0, %c0_0, %c0_1, %c0_2] : memref<1x18x9x128xf32, #tpu.memory_space<vmem>>, vector<1x18x9x128xf32>
    %1 = vector.shape_cast %0 : vector<1x18x9x128xf32> to vector<18x9x128xf32>
    %c0_3 = arith.constant 0 : index
    %c0_4 = arith.constant 0 : index
    %c0_5 = arith.constant 0 : index
    %c0_6 = arith.constant 0 : index
    %2 = vector.load %arg2[%c0_3, %c0_4, %c0_5, %c0_6] : memref<1x18x9x128xf32, #tpu.memory_space<vmem>>, vector<1x18x9x128xf32>
    %3 = vector.shape_cast %2 : vector<1x18x9x128xf32> to vector<18x9x128xf32>
    %4 = vector.extract_strided_slice %1 {offsets = [0, 0, 0], sizes = [18, 8, 128], strides = [1, 1, 1]} : vector<18x9x128xf32> to vector<18x8x128xf32>
    %5 = vector.extract_strided_slice %3 {offsets = [0, 0, 0], sizes = [18, 8, 128], strides = [1, 1, 1]} : vector<18x9x128xf32> to vector<18x8x128xf32>
    %6 = arith.maximumf %4, %5 : vector<18x8x128xf32>
    %7 = vector.extract_strided_slice %1 {offsets = [0, 1, 0], sizes = [18, 8, 128], strides = [1, 1, 1]} : vector<18x9x128xf32> to vector<18x8x128xf32>
    %8 = arith.maximumf %6, %7 : vector<18x8x128xf32>
    %9 = vector.extract_strided_slice %8 {offsets = [0, 0, 0], sizes = [16, 8, 128], strides = [1, 1, 1]} : vector<18x8x128xf32> to vector<16x8x128xf32>
    %10 = vector.shape_cast %9 : vector<16x8x128xf32> to vector<8x2x8x128xf32>
    %11 = vector.extract_strided_slice %8 {offsets = [2, 0, 0], sizes = [16, 8, 128], strides = [1, 1, 1]} : vector<18x8x128xf32> to vector<16x8x128xf32>
    %12 = vector.shape_cast %11 : vector<16x8x128xf32> to vector<8x2x8x128xf32>
    %13 = vector.extract_strided_slice %12 {offsets = [0, 0, 0, 0], sizes = [8, 1, 8, 128], strides = [1, 1, 1, 1]} : vector<8x2x8x128xf32> to vector<8x1x8x128xf32>
    %14 = vector.shape_cast %13 : vector<8x1x8x128xf32> to vector<8x8x128xf32>
    %15 = vector.extract_strided_slice %10 {offsets = [0, 0, 0, 0], sizes = [8, 1, 8, 128], strides = [1, 1, 1, 1]} : vector<8x2x8x128xf32> to vector<8x1x8x128xf32>
    %16 = vector.shape_cast %15 : vector<8x1x8x128xf32> to vector<8x8x128xf32>
    %17 = vector.extract_strided_slice %10 {offsets = [0, 1, 0, 0], sizes = [8, 1, 8, 128], strides = [1, 1, 1, 1]} : vector<8x2x8x128xf32> to vector<8x1x8x128xf32>
    %18 = vector.shape_cast %17 : vector<8x1x8x128xf32> to vector<8x8x128xf32>
    %19 = arith.maximumf %16, %18 : vector<8x8x128xf32>
    %20 = arith.maximumf %19, %14 : vector<8x8x128xf32>
    %c0_7 = arith.constant 0 : index
    %c0_8 = arith.constant 0 : index
    %c0_9 = arith.constant 0 : index
    %c0_10 = arith.constant 0 : index
    %21 = vector.load %arg3[%c0_7, %c0_8, %c0_9, %c0_10] : memref<1x8x8x128xf32, #tpu.memory_space<vmem>>, vector<1x8x8x128xf32>
    %22 = vector.shape_cast %21 : vector<1x8x8x128xf32> to vector<8x8x128xf32>
    %23 = vector.shape_cast %20 : vector<8x8x128xf32> to vector<1x8x8x128xf32>
    tpu.vector_store %arg3[%c0_7, %c0_8, %c0_9, %c0_10], %23 {strides = array<i32>} : memref<1x8x8x128xf32, #tpu.memory_space<vmem>>, vector<1x8x8x128xf32>,
    return
  }
  func.func @transform_0(%arg0: i32) -> (i32, i32, i32, i32) {
    %c0_i32 = arith.constant 0 : i32
    %c0_i32_0 = arith.constant 0 : i32
    %c0_i32_1 = arith.constant 0 : i32
    %c0_i32_2 = arith.constant 0 : i32
    return %arg0, %c0_i32, %c0_i32_0, %c0_i32_1 : i32, i32, i32, i32
  }
  func.func @transform_1(%arg0: i32) -> (i32, i32, i32, i32) {
    %c0_i32 = arith.constant 0 : i32
    %c0_i32_0 = arith.constant 0 : i32
    %c0_i32_1 = arith.constant 0 : i32
    %c0_i32_2 = arith.constant 0 : i32
    return %arg0, %c0_i32, %c0_i32_0, %c0_i32_1 : i32, i32, i32, i32
  }
  func.func @transform_2(%arg0: i32) -> (i32, i32, i32, i32) {
    %c0_i32 = arith.constant 0 : i32
    %c0_i32_0 = arith.constant 0 : i32
    %c0_i32_1 = arith.constant 0 : i32
    %c0_i32_2 = arith.constant 0 : i32
    return %arg0, %c0_i32, %c0_i32_0, %c0_i32_1 : i32, i32, i32, i32
  }
}

</mosaic_0001>

<llo_original>
// kernel: visible_stem_forward.2
$region0: #{visible_stem_forward.2}
  #allocation0 [shape = 'u32[]', space=smem, size = 0x4, offset = 0x4, fixed_abs, tag = 'smem constant byte address 0x4 - core index']
  #allocation1 [shape = 'u32[144,128]{1,0:T(1,128)}', space=vmem, size = 0x12000, scoped, tag = 'internal scratch']
  %s0 = inlined_call_operand.vmem [shape: f32[512,256], index: 0, kind: input, shape index: {}]
  %s1 = inlined_call_operand.vmem [shape: f32[256,128], index: 1, kind: input, shape index: {}]
  %s2 = inlined_call_operand.vmem [shape: f32[1,128], index: 2, kind: input, shape index: {}]
  %s3 = inlined_call_operand.vmem [shape: f32[1,128], index: 3, kind: input, shape index: {}]
  %s4 = inlined_call_operand.vmem [shape: f32[512,128], index: 4, kind: output, shape index: {}]
  %s5 = sld [smem:[#allocation0]]
  $region49: #{visible_stem_forward.2} parent=0
    _
  %s7 = ssub.s32 1, %s5
  %s8 = scalar_select 0, %s7, %s5
  loop: start=0, step=1, limit=4
  $region2: #{visible_stem_forward.2} parent=0 // loop_pre_header
    _
  $region3: #{visible_stem_forward.2} parent=0 // loop_header
    %s10 = sphi 0, %s14
    %p11 = scmp.ge.s32.totalorder %s10, 4
    %s20 = sphi 0, %s22
    %s23 = sphi 0, %s20
    %s24 = sphi 0, %s23
    %s40 = sphi 0, %s24
    %s44 = sphi 0, %s44
    %s46 = sphi 0, %s44
    %s47 = sphi 0, %s46
    %s61 = sphi 0, %s47
    %s65 = sphi 0, %s65
    %s67 = sphi 0, %s65
    %s68 = sphi 0, %s67
    %s82 = sphi 0, %s68
    %s86 = sphi 0, %s86
    %s88 = sphi 0, %s86
    %s89 = sphi 0, %s88
    %s103 = sphi 0, %s89
    %s109 = sphi 0, %s111
    %s112 = sphi 0, %s109
    %s113 = sphi 0, %s112
    %s129 = sphi 0, %s113
  $region4: #{visible_stem_forward.2} parent=0 // loop_header_branch
    %13 = sbr.rel (%p11) target = $region8
  $region5: #{visible_stem_forward.2} parent=0 // loop_body
    %s15 = ssub.s32 %s10, 1
    %s16 = ssub.s32 %s10, 2
    %s17 = sadd.s32 %s10, 1
    %s18 = ssub.s32 %s10, %s17
    %p19 = scmp.eq.s32.totalorder %s18, 0
    %s21 = sadd.s32 %s20, 1
    %s22 = scalar_select %p19, %s20, %s21
    %p25 = pneg %p19
    %p26 = scmp.eq.s32.totalorder %s10, 1
    %p27 = por %p25, %p26
    %p28 = scmp.ne.s32.totalorder %s20, %s23
    %p29 = scmp.eq.s32.totalorder %s10, 0
    %p30 = por %p28, %p29
    %p31 = scmp.ne.s32.totalorder %s20, %s23
    %p32 = scmp.eq.s32.totalorder %s15, 1
    %p33 = por %p31, %p32
    %p34 = scmp.ne.s32.totalorder %s23, %s24
    %p35 = scmp.eq.s32.totalorder %s15, 0
    %p36 = por %p34, %p35
    %p37 = scmp.ne.s32.totalorder %s23, %s24
    %p38 = scmp.eq.s32.totalorder %s16, 1
    %p39 = por %p37, %p38
    %p41 = scmp.ne.s32.totalorder %s24, %s40
    %p42 = scmp.eq.s32.totalorder %s16, 0
    %p43 = por %p41, %p42
    %s45 = sadd.s32 %s44, 1
    %p48 = scmp.eq.s32.totalorder %s10, 1
    %p49 = scmp.ne.s32.totalorder %s44, %s46
    %p50 = scmp.eq.s32.totalorder %s10, 0
    %p51 = por %p49, %p50
    %p52 = scmp.ne.s32.totalorder %s44, %s46
    %p53 = scmp.eq.s32.totalorder %s15, 1
    %p54 = por %p52, %p53
    %p55 = scmp.ne.s32.totalorder %s46, %s47
    %p56 = scmp.eq.s32.totalorder %s15, 0
    %p57 = por %p55, %p56
    %p58 = scmp.ne.s32.totalorder %s46, %s47
    %p59 = scmp.eq.s32.totalorder %s16, 1
    %p60 = por %p58, %p59
    %p62 = scmp.ne.s32.totalorder %s47, %s61
    %p63 = scmp.eq.s32.totalorder %s16, 0
    %p64 = por %p62, %p63
    %s66 = sadd.s32 %s65, 1
    %p69 = scmp.eq.s32.totalorder %s10, 1
    %p70 = scmp.ne.s32.totalorder %s65, %s67
    %p71 = scmp.eq.s32.totalorder %s10, 0
    %p72 = por %p70, %p71
    %p73 = scmp.ne.s32.totalorder %s65, %s67
    %p74 = scmp.eq.s32.totalorder %s15, 1
    %p75 = por %p73, %p74
    %p76 = scmp.ne.s32.totalorder %s67, %s68
    %p77 = scmp.eq.s32.totalorder %s15, 0
    %p78 = por %p76, %p77
    %p79 = scmp.ne.s32.totalorder %s67, %s68
    %p80 = scmp.eq.s32.totalorder %s16, 1
    %p81 = por %p79, %p80
    %p83 = scmp.ne.s32.totalorder %s68, %s82
    %p84 = scmp.eq.s32.totalorder %s16, 0
    %p85 = por %p83, %p84
    %s87 = sadd.s32 %s86, 1
    %p90 = scmp.eq.s32.totalorder %s10, 1
    %p91 = scmp.ne.s32.totalorder %s86, %s88
    %p92 = scmp.eq.s32.totalorder %s10, 0
    %p93 = por %p91, %p92
    %p94 = scmp.ne.s32.totalorder %s86, %s88
    %p95 = scmp.eq.s32.totalorder %s15, 1
    %p96 = por %p94, %p95
    %p97 = scmp.ne.s32.totalorder %s88, %s89
    %p98 = scmp.eq.s32.totalorder %s15, 0
    %p99 = por %p97, %p98
    %p100 = scmp.ne.s32.totalorder %s88, %s89
    %p101 = scmp.eq.s32.totalorder %s16, 1
    %p102 = por %p100, %p101
    %p104 = scmp.ne.s32.totalorder %s89, %s103
    %p105 = scmp.eq.s32.totalorder %s16, 0
    %p106 = por %p104, %p105
    %s107 = ssub.s32 %s10, %s17
    %p108 = scmp.eq.s32.totalorder %s107, 0
    %s110 = sadd.s32 %s109, 1
    %s111 = scalar_select %p108, %s109, %s110
    %p114 = pneg %p108
    %p115 = scmp.eq.s32.totalorder %s10, 1
    %p116 = por %p114, %p115
    %p117 = scmp.ne.s32.totalorder %s109, %s112
    %p118 = scmp.eq.s32.totalorder %s10, 0
    %p119 = por %p117, %p118
    %p120 = scmp.ne.s32.totalorder %s109, %s112
    %p121 = scmp.eq.s32.totalorder %s15, 1
    %p122 = por %p120, %p121
    %p123 = scmp.ne.s32.totalorder %s112, %s113
    %p124 = scmp.eq.s32.totalorder %s15, 0
    %p125 = por %p123, %p124
    %p126 = scmp.ne.s32.totalorder %s112, %s113
    %p127 = scmp.eq.s32.totalorder %s16, 1
    %p128 = por %p126, %p127
    %p130 = scmp.ne.s32.totalorder %s113, %s129
    %p131 = scmp.eq.s32.totalorder %s16, 0
    %p132 = por %p130, %p131
    %p133 = scmp.le.s32.totalorder 1, %s10
    %p134 = scmp.lt.s32.totalorder %s10, 3
    %p135 = pnand %p133, %p134
    %p136 = pneg %p135
    // Predicated region
    $region9: #{visible_stem_forward.2} parent=5 // pred_check
      _
    $region10: #{visible_stem_forward.2} parent=5 // pred_check_branch
      %138 = sbr.rel (%p135) target = $region12
    $region11: #{visible_stem_forward.2} parent=5 // pred_region
      %s139 = ssub.s32 %s10, 1
      // Predicated region
      $region13: #{visible_stem_forward.2} parent=11 // pred_check
        %p140 = pneg %p57
      $region14: #{visible_stem_forward.2} parent=11 // pred_check_branch
        %142 = sbr.rel (%p140) target = $region16
      $region15: #{visible_stem_forward.2} parent=11 // pred_region
        _
      $region16: #{visible_stem_forward.2} parent=11 // pred_fallthru
        _
      // Predicated region
      $region17: #{visible_stem_forward.2} parent=11 // pred_check
        %p143 = pneg %p78
      $region18: #{visible_stem_forward.2} parent=11 // pred_check_branch
        %145 = sbr.rel (%p143) target = $region20
      $region19: #{visible_stem_forward.2} parent=11 // pred_region
        _
      $region20: #{visible_stem_forward.2} parent=11 // pred_fallthru
        _
      // Predicated region
      $region21: #{visible_stem_forward.2} parent=11 // pred_check
        %p146 = pneg %p99
      $region22: #{visible_stem_forward.2} parent=11 // pred_check_branch
        %148 = sbr.rel (%p146) target = $region24
      $region23: #{visible_stem_forward.2} parent=11 // pred_region
        _
      $region24: #{visible_stem_forward.2} parent=11 // pred_fallthru
        _
    $region12: #{visible_stem_forward.2} parent=5 // pred_fallthru
      _
    %p149 = scmp.lt.s32.totalorder %s10, 2
    // Predicated region
    $region25: #{visible_stem_forward.2} parent=5 // pred_check
      %p150 = pneg %p149
    $region26: #{visible_stem_forward.2} parent=5 // pred_check_branch
      %152 = sbr.rel (%p150) target = $region28
    $region27: #{visible_stem_forward.2} parent=5 // pred_region
      // Predicated region
      $region29: #{visible_stem_forward.2} parent=27 // pred_check
        %p153 = pneg %p30
      $region30: #{visible_stem_forward.2} parent=27 // pred_check_branch
        %155 = sbr.rel (%p153) target = $region32
      $region31: #{visible_stem_forward.2} parent=27 // pred_region
        %s156 = smul.u32 32, %s10
        %p157 = scmp.lt.s32.totalorder %s156, 63
        %s158 = scalar_select %p157, %s156, 63
        %s159 = smul.addr %s158, 2
        %s160 = smul.addr %s159, 8
        %s161 = scalar_lea.vmem %s0, %s160
        %s162 = smul.u32 32, %s10
      $region32: #{visible_stem_forward.2} parent=27 // pred_fallthru
        _
    $region28: #{visible_stem_forward.2} parent=5 // pred_fallthru
      _
    %p163 = scmp.le.s32.totalorder 1, %s10
    %p164 = scmp.lt.s32.totalorder %s10, 3
    %p165 = pnand %p163, %p164
    %p166 = pneg %p165
    // Predicated region
    $region33: #{visible_stem_forward.2} parent=5 // pred_check
      _
    $region34: #{visible_stem_forward.2} parent=5 // pred_check_branch
      %168 = sbr.rel (%p165) target = $region36
    $region35: #{visible_stem_forward.2} parent=5 // pred_region
      %s169 = ssub.s32 %s10, 1
      %s170 = smul.u32 32, %s15
      %p171 = scmp.lt.s32.totalorder %s170, 63
      %s172 = scalar_select %p171, %s170, 63
      %s173 = smul.addr %s172, 2
      %s174 = smul.addr %s173, 8
      %s175 = scalar_lea.vmem %s0, %s174
      %p176 = pneg %p36
      %p177 = pneg %p33
      %p178 = pneg %p57
      %p179 = pneg %p54
      %p180 = pneg %p78
      %p181 = pneg %p75
      %p182 = pneg %p99
      %p183 = pneg %p96
      %p184 = pneg %p125
      %p185 = pneg %p122
      %s186 = smul.u32 32, %s15
      %p187 = scmp.lt.s32.totalorder %s186, 63
      %s188 = scalar_select %p187, %s186, 63
      %s189 = smul.addr %s188, 8
      %s190 = scalar_lea.vmem %s4, %s189
      %s191 = smul.u32 32, %s15
      %p192 = scmp.lt.s32.totalorder %s191, 63
      %s193 = scalar_select %p192, %s191, 63
      %s194 = smul.addr %s193, 2
      %s195 = smul.addr %s194, 8
      %s196 = scalar_lea.vmem %s0, %s195
      %s197 = smul.u32 32, %s15
      %s198 = smul.u32 32, %s15
      %p199 = scmp.lt.s32.totalorder %s198, 63
      %s200 = scalar_select %p199, %s198, 63
      %s201 = smul.addr %s200, 8
      %s202 = scalar_lea.vmem %s4, %s201
      %s203 = smul.u32 32, %s15
      %v204 = vld [vmem:[%s196] sm:$0xff]
      %v205 = vld [vmem:[%s196 + $0x8] sm:$0xff]
      %v206 = vld [vmem:[%s196 + $0x10] sm:$0xff]
      %v207 = vld [vmem:[%s196 + $0x18] sm:$0xff]
      %v208 = vld [vmem:[%s196 + $0x20] sm:$0xff]
      %v209 = vld [vmem:[%s196 + $0x28] sm:$0xff]
      %v210 = vld [vmem:[%s196 + $0x30] sm:$0xff]
      %v211 = vld [vmem:[%s196 + $0x38] sm:$0xff]
      %v212 = vld [vmem:[%s196 + $0x40] sm:$0xff]
      %v213 = vld [vmem:[%s196 + $0x48] sm:$0xff]
      %v214 = vld [vmem:[%s196 + $0x50] sm:$0xff]
      %v215 = vld [vmem:[%s196 + $0x58] sm:$0xff]
      %v216 = vld [vmem:[%s196 + $0x60] sm:$0xff]
      %v217 = vld [vmem:[%s196 + $0x68] sm:$0xff]
      %v218 = vld [vmem:[%s196 + $0x70] sm:$0xff]
      %v219 = vld [vmem:[%s196 + $0x78] sm:$0xff]
      %v220 = vld [vmem:[%s196 + $0x80] sm:$0xff]
      %v221 = vld [vmem:[%s196 + $0x88] sm:$0xff]
      %v222 = vld [vmem:[%s196 + $0x90] sm:$0xff]
      %v223 = vld [vmem:[%s196 + $0x98] sm:$0xff]
      %v224 = vld [vmem:[%s196 + $0xa0] sm:$0xff]
      %v225 = vld [vmem:[%s196 + $0xa8] sm:$0xff]
      %v226 = vld [vmem:[%s196 + $0xb0] sm:$0xff]
      %v227 = vld [vmem:[%s196 + $0xb8] sm:$0xff]
      %v228 = vld [vmem:[%s196 + $0xc0] sm:$0xff]
      %v229 = vld [vmem:[%s196 + $0xc8] sm:$0xff]
      %v230 = vld [vmem:[%s196 + $0xd0] sm:$0xff]
      %v231 = vld [vmem:[%s196 + $0xd8] sm:$0xff]
      %v232 = vld [vmem:[%s196 + $0xe0] sm:$0xff]
      %v233 = vld [vmem:[%s196 + $0xe8] sm:$0xff]
      %v234 = vld [vmem:[%s196 + $0xf0] sm:$0xff]
      %v235 = vld [vmem:[%s196 + $0xf8] sm:$0xff]
      %v236 = vld [vmem:[%s196 + $0x100] sm:$0xff]
      %v237 = vld [vmem:[%s196 + $0x108] sm:$0xff]
      %v238 = vld [vmem:[%s196 + $0x110] sm:$0xff]
      %v239 = vld [vmem:[%s196 + $0x118] sm:$0xff]
      %v240 = vld [vmem:[%s196 + $0x120] sm:$0xff]
      %v241 = vld [vmem:[%s196 + $0x128] sm:$0xff]
      %v242 = vld [vmem:[%s196 + $0x130] sm:$0xff]
      %v243 = vld [vmem:[%s196 + $0x138] sm:$0xff]
      %v244 = vld [vmem:[%s196 + $0x140] sm:$0xff]
      %v245 = vld [vmem:[%s196 + $0x148] sm:$0xff]
      %v246 = vld [vmem:[%s196 + $0x150] sm:$0xff]
      %v247 = vld [vmem:[%s196 + $0x158] sm:$0xff]
      %v248 = vld [vmem:[%s196 + $0x160] sm:$0xff]
      %v249 = vld [vmem:[%s196 + $0x168] sm:$0xff]
      %v250 = vld [vmem:[%s196 + $0x170] sm:$0xff]
      %v251 = vld [vmem:[%s196 + $0x178] sm:$0xff]
      %v252 = vld [vmem:[%s196 + $0x180] sm:$0xff]
      %v253 = vld [vmem:[%s196 + $0x188] sm:$0xff]
      %v254 = vld [vmem:[%s196 + $0x190] sm:$0xff]
      %v255 = vld [vmem:[%s196 + $0x198] sm:$0xff]
      %v256 = vld [vmem:[%s196 + $0x1a0] sm:$0xff]
      %v257 = vld [vmem:[%s196 + $0x1a8] sm:$0xff]
      %v258 = vld [vmem:[%s196 + $0x1b0] sm:$0xff]
      %v259 = vld [vmem:[%s196 + $0x1b8] sm:$0xff]
      %v260 = vld [vmem:[%s196 + $0x1c0] sm:$0xff]
      %v261 = vld [vmem:[%s196 + $0x1c8] sm:$0xff]
      %v262 = vld [vmem:[%s196 + $0x1d0] sm:$0xff]
      %v263 = vld [vmem:[%s196 + $0x1d8] sm:$0xff]
      %v264 = vld [vmem:[%s196 + $0x1e0] sm:$0xff]
      %v265 = vld [vmem:[%s196 + $0x1e8] sm:$0xff]
      %v266 = vld [vmem:[%s196 + $0x1f0] sm:$0xff]
      %v267 = vld [vmem:[%s196 + $0x1f8] sm:$0xff]
      %v268 = vld [vmem:[%s1] sm:$0xff]
      %v269 = vld [vmem:[%s1 + $0x8] sm:$0xff]
      %v270 = vld [vmem:[%s1 + $0x10] sm:$0xff]
      %v271 = vld [vmem:[%s1 + $0x18] sm:$0xff]
      %v272 = vld [vmem:[%s1 + $0x20] sm:$0xff]
      %v273 = vld [vmem:[%s1 + $0x28] sm:$0xff]
      %v274 = vld [vmem:[%s1 + $0x30] sm:$0xff]
      %v275 = vld [vmem:[%s1 + $0x38] sm:$0xff]
      %v276 = vld [vmem:[%s1 + $0x40] sm:$0xff]
      %v277 = vld [vmem:[%s1 + $0x48] sm:$0xff]
      %v278 = vld [vmem:[%s1 + $0x50] sm:$0xff]
      %v279 = vld [vmem:[%s1 + $0x58] sm:$0xff]
      %v280 = vld [vmem:[%s1 + $0x60] sm:$0xff]
      %v281 = vld [vmem:[%s1 + $0x68] sm:$0xff]
      %v282 = vld [vmem:[%s1 + $0x70] sm:$0xff]
      %v283 = vld [vmem:[%s1 + $0x78] sm:$0xff]
      %v284 = vld [vmem:[%s1 + $0x80] sm:$0xff]
      %v285 = vld [vmem:[%s1 + $0x88] sm:$0xff]
      %v286 = vld [vmem:[%s1 + $0x90] sm:$0xff]
      %v287 = vld [vmem:[%s1 + $0x98] sm:$0xff]
      %v288 = vld [vmem:[%s1 + $0xa0] sm:$0xff]
      %v289 = vld [vmem:[%s1 + $0xa8] sm:$0xff]
      %v290 = vld [vmem:[%s1 + $0xb0] sm:$0xff]
      %v291 = vld [vmem:[%s1 + $0xb8] sm:$0xff]
      %v292 = vld [vmem:[%s1 + $0xc0] sm:$0xff]
      %v293 = vld [vmem:[%s1 + $0xc8] sm:$0xff]
      %v294 = vld [vmem:[%s1 + $0xd0] sm:$0xff]
      %v295 = vld [vmem:[%s1 + $0xd8] sm:$0xff]
      %v296 = vld [vmem:[%s1 + $0xe0] sm:$0xff]
      %v297 = vld [vmem:[%s1 + $0xe8] sm:$0xff]
      %v298 = vld [vmem:[%s1 + $0xf0] sm:$0xff]
      %v299 = vld [vmem:[%s1 + $0xf8] sm:$0xff]
      %300 = vmatprep.subr.mxu0 0.0
      %301 = vmatpush1.msra.mxu0 %v268
      %302 = vmatprep.subr.mxu0 0.0
      %303 = vmatpush1.msra.mxu0 %v269
      %304 = vmatprep.subr.mxu0 0.0
      %305 = vmatpush1.msra.mxu0 %v270
      %306 = vmatprep.subr.mxu0 0.0
      %307 = vmatpush1.msra.mxu0 %v271
      %308 = vmatprep.subr.mxu0 0.0
      %309 = vmatpush1.msra.mxu0 %v272
      %310 = vmatprep.subr.mxu0 0.0
      %311 = vmatpush1.msra.mxu0 %v273
      %312 = vmatprep.subr.mxu0 0.0
      %313 = vmatpush1.msra.mxu0 %v274
      %314 = vmatprep.subr.mxu0 0.0
      %315 = vmatpush1.msra.mxu0 %v275
      %316 = vmatprep.subr.mxu0 0.0
      %317 = vmatpush1.msra.mxu0 %v276
      %318 = vmatprep.subr.mxu0 0.0
      %319 = vmatpush1.msra.mxu0 %v277
      %320 = vmatprep.subr.mxu0 0.0
      %321 = vmatpush1.msra.mxu0 %v278
      %322 = vmatprep.subr.mxu0 0.0
      %323 = vmatpush1.msra.mxu0 %v279
      %324 = vmatprep.subr.mxu0 0.0
      %325 = vmatpush1.msra.mxu0 %v280
      %326 = vmatprep.subr.mxu0 0.0
      %327 = vmatpush1.msra.mxu0 %v281
      %328 = vmatprep.subr.mxu0 0.0
      %329 = vmatpush1.msra.mxu0 %v282
      %330 = vmatprep.subr.mxu0 0.0
      %331 = vmatpush1.msra.mxu0 %v283
      %332 = vmatprep.subr.mxu0 0.0
      %333 = vmatpush1.msra.mxu0 %v284
      %334 = vmatprep.subr.mxu0 0.0
      %335 = vmatpush1.msra.mxu0 %v285
      %336 = vmatprep.subr.mxu0 0.0
      %337 = vmatpush1.msra.mxu0 %v286
      %338 = vmatprep.subr.mxu0 0.0
      %339 = vmatpush1.msra.mxu0 %v287
      %340 = vmatprep.subr.mxu0 0.0
      %341 = vmatpush1.msra.mxu0 %v288
      %342 = vmatprep.subr.mxu0 0.0
      %343 = vmatpush1.msra.mxu0 %v289
      %344 = vmatprep.subr.mxu0 0.0
      %345 = vmatpush1.msra.mxu0 %v290
      %346 = vmatprep.subr.mxu0 0.0
      %347 = vmatpush1.msra.mxu0 %v291
      %348 = vmatprep.subr.mxu0 0.0
      %349 = vmatpush1.msra.mxu0 %v292
      %350 = vmatprep.subr.mxu0 0.0
      %351 = vmatpush1.msra.mxu0 %v293
      %352 = vmatprep.subr.mxu0 0.0
      %353 = vmatpush1.msra.mxu0 %v294
      %354 = vmatprep.subr.mxu0 0.0
      %355 = vmatpush1.msra.mxu0 %v295
      %356 = vmatprep.subr.mxu0 0.0
      %357 = vmatpush1.msra.mxu0 %v296
      %358 = vmatprep.subr.mxu0 0.0
      %359 = vmatpush1.msra.mxu0 %v297
      %360 = vmatprep.subr.mxu0 0.0
      %361 = vmatpush1.msra.mxu0 %v298
      %362 = vmatprep.subr.mxu0 0.0
      %363 = vmatpush1.msra.mxu0 %v299
      %364 = vmatprep.mubr.f32.mxu0 %v205
      %365 = vmatmul.mubr.f32.gmra.mrb[0].mxu0 %v204
      %v366 = vpop.f32.mrb[0].mxu0
      %v367 = vadd.f32 0.0, %v366
      %v368 = vpop.f32.mrb[0].mxu0
      %369 = vmatprep.mubr.f32.mxu0 %v207
      %370 = vmatmul.mubr.f32.gmra.mrb[0].mxu0 %v206
      %v371 = vpop.f32.mrb[0].mxu0
      %v372 = vadd.f32 0.0, %v371
      %v373 = vpop.f32.mrb[0].mxu0
      %374 = vmatprep.mubr.f32.mxu0 %v209
      %375 = vmatmul.mubr.f32.gmra.mrb[0].mxu0 %v208
      %v376 = vpop.f32.mrb[0].mxu0
      %v377 = vadd.f32 0.0, %v376
      %v378 = vpop.f32.mrb[0].mxu0
      %379 = vmatprep.mubr.f32.mxu0 %v211
      %380 = vmatmul.mubr.f32.gmra.mrb[0].mxu0 %v210
      %v381 = vpop.f32.mrb[0].mxu0
      %v382 = vadd.f32 0.0, %v381
      %v383 = vpop.f32.mrb[0].mxu0
      %384 = vmatprep.mubr.f32.mxu0 %v213
      %385 = vmatmul.mubr.f32.gmra.mrb[0].mxu0 %v212
      %v386 = vpop.f32.mrb[0].mxu0
      %v387 = vadd.f32 0.0, %v386
      %v388 = vpop.f32.mrb[0].mxu0
      %389 = vmatprep.mubr.f32.mxu0 %v215
      %390 = vmatmul.mubr.f32.gmra.mrb[0].mxu0 %v214
      %v391 = vpop.f32.mrb[0].mxu0
      %v392 = vadd.f32 0.0, %v391
      %v393 = vpop.f32.mrb[0].mxu0
      %394 = vmatprep.mubr.f32.mxu0 %v217
      %395 = vmatmul.mubr.f32.gmra.mrb[0].mxu0 %v216
      %v396 = vpop.f32.mrb[0].mxu0
      %v397 = vadd.f32 0.0, %v396
      %v398 = vpop.f32.mrb[0].mxu0
      %399 = vmatprep.mubr.f32.mxu0 %v219
      %400 = vmatmul.mubr.f32.gmra.mrb[0].mxu0 %v218
      %v401 = vpop.f32.mrb[0].mxu0
      %v402 = vadd.f32 0.0, %v401
      %v403 = vpop.f32.mrb[0].mxu0
      %404 = vmatprep.mubr.f32.mxu0 %v221
      %405 = vmatmul.mubr.f32.gmra.mrb[0].mxu0 %v220
      %v406 = vpop.f32.mrb[0].mxu0
      %v407 = vadd.f32 0.0, %v406
      %v408 = vpop.f32.mrb[0].mxu0
      %409 = vmatprep.mubr.f32.mxu0 %v223
      %410 = vmatmul.mubr.f32.gmra.mrb[0].mxu0 %v222
      %v411 = vpop.f32.mrb[0].mxu0
      %v412 = vadd.f32 0.0, %v411
      %v413 = vpop.f32.mrb[0].mxu0
      %414 = vmatprep.mubr.f32.mxu0 %v225
      %415 = vmatmul.mubr.f32.gmra.mrb[0].mxu0 %v224
      %v416 = vpop.f32.mrb[0].mxu0
      %v417 = vadd.f32 0.0, %v416
      %v418 = vpop.f32.mrb[0].mxu0
      %419 = vmatprep.mubr.f32.mxu0 %v227
      %420 = vmatmul.mubr.f32.gmra.mrb[0].mxu0 %v226
      %v421 = vpop.f32.mrb[0].mxu0
      %v422 = vadd.f32 0.0, %v421
      %v423 = vpop.f32.mrb[0].mxu0
      %424 = vmatprep.mubr.f32.mxu0 %v229
      %425 = vmatmul.mubr.f32.gmra.mrb[0].mxu0 %v228
      %v426 = vpop.f32.mrb[0].mxu0
      %v427 = vadd.f32 0.0, %v426
      %v428 = vpop.f32.mrb[0].mxu0
      %429 = vmatprep.mubr.f32.mxu0 %v231
      %430 = vmatmul.mubr.f32.gmra.mrb[0].mxu0 %v230
      %v431 = vpop.f32.mrb[0].mxu0
      %v432 = vadd.f32 0.0, %v431
      %v433 = vpop.f32.mrb[0].mxu0
      %434 = vmatprep.mubr.f32.mxu0 %v233
      %435 = vmatmul.mubr.f32.gmra.mrb[0].mxu0 %v232
      %v436 = vpop.f32.mrb[0].mxu0
      %v437 = vadd.f32 0.0, %v436
      %v438 = vpop.f32.mrb[0].mxu0
      %439 = vmatprep.mubr.f32.mxu0 %v235
      %440 = vmatmul.mubr.f32.gmra.mrb[0].mxu0 %v234
      %v441 = vpop.f32.mrb[0].mxu0
      %v442 = vadd.f32 0.0, %v441
      %v443 = vpop.f32.mrb[0].mxu0
      %444 = vmatprep.mubr.f32.mxu0 %v237
      %445 = vmatmul.mubr.f32.gmra.mrb[0].mxu0 %v236
      %v446 = vpop.f32.mrb[0].mxu0
      %v447 = vadd.f32 0.0, %v446
      %v448 = vpop.f32.mrb[0].mxu0
      %449 = vmatprep.mubr.f32.mxu0 %v239
      %450 = vmatmul.mubr.f32.gmra.mrb[0].mxu0 %v238
      %v451 = vpop.f32.mrb[0].mxu0
      %v452 = vadd.f32 0.0, %v451
      %v453 = vpop.f32.mrb[0].mxu0
      %454 = vmatprep.mubr.f32.mxu0 %v241
      %455 = vmatmul.mubr.f32.gmra.mrb[0].mxu0 %v240
      %v456 = vpop.f32.mrb[0].mxu0
      %v457 = vadd.f32 0.0, %v456
      %v458 = vpop.f32.mrb[0].mxu0
      %459 = vmatprep.mubr.f32.mxu0 %v243
      %460 = vmatmul.mubr.f32.gmra.mrb[0].mxu0 %v242
      %v461 = vpop.f32.mrb[0].mxu0
      %v462 = vadd.f32 0.0, %v461
      %v463 = vpop.f32.mrb[0].mxu0
      %464 = vmatprep.mubr.f32.mxu0 %v245
      %465 = vmatmul.mubr.f32.gmra.mrb[0].mxu0 %v244
      %v466 = vpop.f32.mrb[0].mxu0
      %v467 = vadd.f32 0.0, %v466
      %v468 = vpop.f32.mrb[0].mxu0
      %469 = vmatprep.mubr.f32.mxu0 %v247
      %470 = vmatmul.mubr.f32.gmra.mrb[0].mxu0 %v246
      %v471 = vpop.f32.mrb[0].mxu0
      %v472 = vadd.f32 0.0, %v471
      %v473 = vpop.f32.mrb[0].mxu0
      %474 = vmatprep.mubr.f32.mxu0 %v249
      %475 = vmatmul.mubr.f32.gmra.mrb[0].mxu0 %v248
      %v476 = vpop.f32.mrb[0].mxu0
      %v477 = vadd.f32 0.0, %v476
      %v478 = vpop.f32.mrb[0].mxu0
      %479 = vmatprep.mubr.f32.mxu0 %v251
      %480 = vmatmul.mubr.f32.gmra.mrb[0].mxu0 %v250
      %v481 = vpop.f32.mrb[0].mxu0
      %v482 = vadd.f32 0.0, %v481
      %v483 = vpop.f32.mrb[0].mxu0
      %484 = vmatprep.mubr.f32.mxu0 %v253
      %485 = vmatmul.mubr.f32.gmra.mrb[0].mxu0 %v252
      %v486 = vpop.f32.mrb[0].mxu0
      %v487 = vadd.f32 0.0, %v486
      %v488 = vpop.f32.mrb[0].mxu0
      %489 = vmatprep.mubr.f32.mxu0 %v255
      %490 = vmatmul.mubr.f32.gmra.mrb[0].mxu0 %v254
      %v491 = vpop.f32.mrb[0].mxu0
      %v492 = vadd.f32 0.0, %v491
      %v493 = vpop.f32.mrb[0].mxu0
      %494 = vmatprep.mubr.f32.mxu0 %v257
      %495 = vmatmul.mubr.f32.gmra.mrb[0].mxu0 %v256
      %v496 = vpop.f32.mrb[0].mxu0
      %v497 = vadd.f32 0.0, %v496
      %v498 = vpop.f32.mrb[0].mxu0
      %499 = vmatprep.mubr.f32.mxu0 %v259
      %500 = vmatmul.mubr.f32.gmra.mrb[0].mxu0 %v258
      %v501 = vpop.f32.mrb[0].mxu0
      %v502 = vadd.f32 0.0, %v501
      %v503 = vpop.f32.mrb[0].mxu0
      %504 = vmatprep.mubr.f32.mxu0 %v261
      %505 = vmatmul.mubr.f32.gmra.mrb[0].mxu0 %v260
      %v506 = vpop.f32.mrb[0].mxu0
      %v507 = vadd.f32 0.0, %v506
      %v508 = vpop.f32.mrb[0].mxu0
      %509 = vmatprep.mubr.f32.mxu0 %v263
      %510 = vmatmul.mubr.f32.gmra.mrb[0].mxu0 %v262
      %v511 = vpop.f32.mrb[0].mxu0
      %v512 = vadd.f32 0.0, %v511
      %v513 = vpop.f32.mrb[0].mxu0
      %514 = vmatprep.mubr.f32.mxu0 %v265
      %515 = vmatmul.mubr.f32.gmra.mrb[0].mxu0 %v264
      %v516 = vpop.f32.mrb[0].mxu0
      %v517 = vadd.f32 0.0, %v516
      %v518 = vpop.f32.mrb[0].mxu0
      %519 = vmatprep.mubr.f32.mxu0 %v267
      %520 = vmatmul.mubr.f32.gmra.mrb[0].mxu0 %v266
      %v521 = vpop.f32.mrb[0].mxu0
      %v522 = vadd.f32 0.0, %v521
      %v523 = vpop.f32.mrb[0].mxu0
      %524 = vdwg.mxu0
      %v525 = vld [vmem:[%s2] sm:$0x1]
      %v527 = vlaneseq
      %v528 = vshrl.u32 %v527, 7
      %v529 = vsub.s32 0, %v528
      %v530 = vrot.slane %v525, %v529
      %v532 = vmul.f32 %v367, %v530
      %v533 = vmul.f32 %v372, %v530
      %v534 = vmul.f32 %v377, %v530
      %v535 = vmul.f32 %v382, %v530
      %v536 = vmul.f32 %v387, %v530
      %v537 = vmul.f32 %v392, %v530
      %v538 = vmul.f32 %v397, %v530
      %v539 = vmul.f32 %v402, %v530
      %v540 = vmul.f32 %v407, %v530
      %v541 = vmul.f32 %v412, %v530
      %v542 = vmul.f32 %v417, %v530
      %v543 = vmul.f32 %v422, %v530
      %v544 = vmul.f32 %v427, %v530
      %v545 = vmul.f32 %v432, %v530
      %v546 = vmul.f32 %v437, %v530
      %v547 = vmul.f32 %v442, %v530
      %v548 = vmul.f32 %v447, %v530
      %v549 = vmul.f32 %v452, %v530
      %v550 = vmul.f32 %v457, %v530
      %v551 = vmul.f32 %v462, %v530
      %v552 = vmul.f32 %v467, %v530
      %v553 = vmul.f32 %v472, %v530
      %v554 = vmul.f32 %v477, %v530
      %v555 = vmul.f32 %v482, %v530
      %v556 = vmul.f32 %v487, %v530
      %v557 = vmul.f32 %v492, %v530
      %v558 = vmul.f32 %v497, %v530
      %v559 = vmul.f32 %v502, %v530
      %v560 = vmul.f32 %v507, %v530
      %v561 = vmul.f32 %v512, %v530
      %v562 = vmul.f32 %v517, %v530
      %v563 = vmul.f32 %v522, %v530
      %v564 = vld [vmem:[%s3] sm:$0x1]
      %v566 = vlaneseq
      %v567 = vshrl.u32 %v566, 7
      %v568 = vsub.s32 0, %v567
      %v569 = vrot.slane %v564, %v568
      %v571 = vadd.f32 %v532, %v569
      %v572 = vadd.f32 %v533, %v569
      %v573 = vadd.f32 %v534, %v569
      %v574 = vadd.f32 %v535, %v569
      %v575 = vadd.f32 %v536, %v569
      %v576 = vadd.f32 %v537, %v569
      %v577 = vadd.f32 %v538, %v569
      %v578 = vadd.f32 %v539, %v569
      %v579 = vadd.f32 %v540, %v569
      %v580 = vadd.f32 %v541, %v569
      %v581 = vadd.f32 %v542, %v569
      %v582 = vadd.f32 %v543, %v569
      %v583 = vadd.f32 %v544, %v569
      %v584 = vadd.f32 %v545, %v569
      %v585 = vadd.f32 %v546, %v569
      %v586 = vadd.f32 %v547, %v569
      %v587 = vadd.f32 %v548, %v569
      %v588 = vadd.f32 %v549, %v569
      %v589 = vadd.f32 %v550, %v569
      %v590 = vadd.f32 %v551, %v569
      %v591 = vadd.f32 %v552, %v569
      %v592 = vadd.f32 %v553, %v569
      %v593 = vadd.f32 %v554, %v569
      %v594 = vadd.f32 %v555, %v569
      %v595 = vadd.f32 %v556, %v569
      %v596 = vadd.f32 %v557, %v569
      %v597 = vadd.f32 %v558, %v569
      %v598 = vadd.f32 %v559, %v569
      %v599 = vadd.f32 %v560, %v569
      %v600 = vadd.f32 %v561, %v569
      %v601 = vadd.f32 %v562, %v569
      %v602 = vadd.f32 %v563, %v569
      %v603 = vmax.f32 %v571, 0.0
      %v604 = vmax.f32 %v572, 0.0
      %v605 = vmax.f32 %v573, 0.0
      %v606 = vmax.f32 %v574, 0.0
      %v607 = vmax.f32 %v575, 0.0
      %v608 = vmax.f32 %v576, 0.0
      %v609 = vmax.f32 %v577, 0.0
      %v610 = vmax.f32 %v578, 0.0
      %v611 = vmax.f32 %v579, 0.0
      %v612 = vmax.f32 %v580, 0.0
      %v613 = vmax.f32 %v581, 0.0
      %v614 = vmax.f32 %v582, 0.0
      %v615 = vmax.f32 %v583, 0.0
      %v616 = vmax.f32 %v584, 0.0
      %v617 = vmax.f32 %v585, 0.0
      %v618 = vmax.f32 %v586, 0.0
      %v619 = vmax.f32 %v587, 0.0
      %v620 = vmax.f32 %v588, 0.0
      %v621 = vmax.f32 %v589, 0.0
      %v622 = vmax.f32 %v590, 0.0
      %v623 = vmax.f32 %v591, 0.0
      %v624 = vmax.f32 %v592, 0.0
      %v625 = vmax.f32 %v593, 0.0
      %v626 = vmax.f32 %v594, 0.0
      %v627 = vmax.f32 %v595, 0.0
      %v628 = vmax.f32 %v596, 0.0
      %v629 = vmax.f32 %v597, 0.0
      %v630 = vmax.f32 %v598, 0.0
      %v631 = vmax.f32 %v599, 0.0
      %v632 = vmax.f32 %v600, 0.0
      %v633 = vmax.f32 %v601, 0.0
      %v634 = vmax.f32 %v602, 0.0
      %635 = vst [vmem:[%s202] sm:$0xff] %v603
      %636 = vst [vmem:[%s202 + $0x8] sm:$0xff] %v604
      %637 = vst [vmem:[%s202 + $0x10] sm:$0xff] %v605
      %638 = vst [vmem:[%s202 + $0x18] sm:$0xff] %v606
      %639 = vst [vmem:[%s202 + $0x20] sm:$0xff] %v607
      %640 = vst [vmem:[%s202 + $0x28] sm:$0xff] %v608
      %641 = vst [vmem:[%s202 + $0x30] sm:$0xff] %v609
      %642 = vst [vmem:[%s202 + $0x38] sm:$0xff] %v610
      %643 = vst [vmem:[%s202 + $0x40] sm:$0xff] %v611
      %644 = vst [vmem:[%s202 + $0x48] sm:$0xff] %v612
      %645 = vst [vmem:[%s202 + $0x50] sm:$0xff] %v613
      %646 = vst [vmem:[%s202 + $0x58] sm:$0xff] %v614
      %647 = vst [vmem:[%s202 + $0x60] sm:$0xff] %v615
      %648 = vst [vmem:[%s202 + $0x68] sm:$0xff] %v616
      %649 = vst [vmem:[%s202 + $0x70] sm:$0xff] %v617
      %650 = vst [vmem:[%s202 + $0x78] sm:$0xff] %v618
      %651 = vst [vmem:[%s202 + $0x80] sm:$0xff] %v619
      %652 = vst [vmem:[%s202 + $0x88] sm:$0xff] %v620
      %653 = vst [vmem:[%s202 + $0x90] sm:$0xff] %v621
      %654 = vst [vmem:[%s202 + $0x98] sm:$0xff] %v622
      %655 = vst [vmem:[%s202 + $0xa0] sm:$0xff] %v623
      %656 = vst [vmem:[%s202 + $0xa8] sm:$0xff] %v624
      %657 = vst [vmem:[%s202 + $0xb0] sm:$0xff] %v625
      %658 = vst [vmem:[%s202 + $0xb8] sm:$0xff] %v626
      %659 = vst [vmem:[%s202 + $0xc0] sm:$0xff] %v627
      %660 = vst [vmem:[%s202 + $0xc8] sm:$0xff] %v628
      %661 = vst [vmem:[%s202 + $0xd0] sm:$0xff] %v629
      %662 = vst [vmem:[%s202 + $0xd8] sm:$0xff] %v630
      %663 = vst [vmem:[%s202 + $0xe0] sm:$0xff] %v631
      %664 = vst [vmem:[%s202 + $0xe8] sm:$0xff] %v632
      %665 = vst [vmem:[%s202 + $0xf0] sm:$0xff] %v633
      %666 = vst [vmem:[%s202 + $0xf8] sm:$0xff] %v634
      %s667 = smul.u32 32, %s15
      %p668 = scmp.lt.s32.totalorder %s667, 63
      %s669 = scalar_select %p668, %s667, 63
      %s670 = smul.addr %s669, 8
      %s671 = scalar_lea.vmem %s4, %s670
      // Predicated region
      $region37: #{visible_stem_forward.2} parent=35 // pred_check
        %p672 = pneg %p122
      $region38: #{visible_stem_forward.2} parent=35 // pred_check_branch
        %674 = sbr.rel (%p672) target = $region40
      $region39: #{visible_stem_forward.2} parent=35 // pred_region
        %s675 = smul.u32 32, %s15
      $region40: #{visible_stem_forward.2} parent=35 // pred_fallthru
        _
    $region36: #{visible_stem_forward.2} parent=5 // pred_fallthru
      _
    %p676 = scmp.le.s32.totalorder 2, %s10
    // Predicated region
    $region41: #{visible_stem_forward.2} parent=5 // pred_check
      %p677 = pneg %p676
    $region42: #{visible_stem_forward.2} parent=5 // pred_check_branch
      %679 = sbr.rel (%p677) target = $region44
    $region43: #{visible_stem_forward.2} parent=5 // pred_region
      %s680 = ssub.s32 %s10, 2
      // Predicated region
      $region45: #{visible_stem_forward.2} parent=43 // pred_check
        %p681 = pneg %p128
      $region46: #{visible_stem_forward.2} parent=43 // pred_check_branch
        %683 = sbr.rel (%p681) target = $region48
      $region47: #{visible_stem_forward.2} parent=43 // pred_region
        %s684 = smul.u32 32, %s16
        %p685 = scmp.lt.s32.totalorder %s684, 63
        %s686 = scalar_select %p685, %s684, 63
        %s687 = smul.addr %s686, 8
        %s688 = scalar_lea.vmem %s4, %s687
      $region48: #{visible_stem_forward.2} parent=43 // pred_fallthru
        _
    $region44: #{visible_stem_forward.2} parent=5 // pred_fallthru
      _
  $region6: #{visible_stem_forward.2} parent=0 // loop_footer
    %s14 = sadd.s32 1, %s10
  $region7: #{visible_stem_forward.2} parent=0 // loop_footer_branch
    %9 = sbr.rel target = $region3
  $region8: #{visible_stem_forward.2} parent=0 // loop_exit
    _

// kernel: visible_stem_forward.3
$region0: #{visible_stem_forward.3}
  #allocation0 [shape = 'u32[]', space=smem, size = 0x4, offset = 0x4, fixed_abs, tag = 'smem constant byte address 0x4 - core index']
  #allocation1 [shape = 'u32[144,128]{1,0:T(1,128)}', space=vmem, size = 0x12000, scoped, tag = 'internal scratch']
  %s0 = inlined_call_operand.vmem [shape: f32[2,18,9,128], index: 0, kind: input, shape index: {}]
  %s1 = inlined_call_operand.vmem [shape: f32[2,18,9,128], index: 1, kind: input, shape index: {}]
  %s2 = inlined_call_operand.vmem [shape: f32[2,8,8,128], index: 2, kind: output, shape index: {}]
  %s3 = sld [smem:[#allocation0]]
  $region41: #{visible_stem_forward.3} parent=0
    _
  %s5 = ssub.s32 1, %s3
  %s6 = scalar_select 0, %s5, %s3
  loop: start=0, step=1, limit=4
  $region2: #{visible_stem_forward.3} parent=0 // loop_pre_header
    _
  $region3: #{visible_stem_forward.3} parent=0 // loop_header
    %s8 = sphi 0, %s12
    %p9 = scmp.ge.s32.totalorder %s8, 4
    %s18 = sphi 0, %s20
    %s21 = sphi 0, %s18
    %s22 = sphi 0, %s21
    %s38 = sphi 0, %s22
    %s44 = sphi 0, %s46
    %s47 = sphi 0, %s44
    %s48 = sphi 0, %s47
    %s64 = sphi 0, %s48
    %s70 = sphi 0, %s72
    %s73 = sphi 0, %s70
    %s74 = sphi 0, %s73
    %s90 = sphi 0, %s74
  $region4: #{visible_stem_forward.3} parent=0 // loop_header_branch
    %11 = sbr.rel (%p9) target = $region8
  $region5: #{visible_stem_forward.3} parent=0 // loop_body
    %s13 = ssub.s32 %s8, 1
    %s14 = ssub.s32 %s8, 2
    %s15 = sadd.s32 %s8, 1
    %s16 = ssub.s32 %s8, %s15
    %p17 = scmp.eq.s32.totalorder %s16, 0
    %s19 = sadd.s32 %s18, 1
    %s20 = scalar_select %p17, %s18, %s19
    %p23 = pneg %p17
    %p24 = scmp.eq.s32.totalorder %s8, 1
    %p25 = por %p23, %p24
    %p26 = scmp.ne.s32.totalorder %s18, %s21
    %p27 = scmp.eq.s32.totalorder %s8, 0
    %p28 = por %p26, %p27
    %p29 = scmp.ne.s32.totalorder %s18, %s21
    %p30 = scmp.eq.s32.totalorder %s13, 1
    %p31 = por %p29, %p30
    %p32 = scmp.ne.s32.totalorder %s21, %s22
    %p33 = scmp.eq.s32.totalorder %s13, 0
    %p34 = por %p32, %p33
    %p35 = scmp.ne.s32.totalorder %s21, %s22
    %p36 = scmp.eq.s32.totalorder %s14, 1
    %p37 = por %p35, %p36
    %p39 = scmp.ne.s32.totalorder %s22, %s38
    %p40 = scmp.eq.s32.totalorder %s14, 0
    %p41 = por %p39, %p40
    %s42 = ssub.s32 %s8, %s15
    %p43 = scmp.eq.s32.totalorder %s42, 0
    %s45 = sadd.s32 %s44, 1
    %s46 = scalar_select %p43, %s44, %s45
    %p49 = pneg %p43
    %p50 = scmp.eq.s32.totalorder %s8, 1
    %p51 = por %p49, %p50
    %p52 = scmp.ne.s32.totalorder %s44, %s47
    %p53 = scmp.eq.s32.totalorder %s8, 0
    %p54 = por %p52, %p53
    %p55 = scmp.ne.s32.totalorder %s44, %s47
    %p56 = scmp.eq.s32.totalorder %s13, 1
    %p57 = por %p55, %p56
    %p58 = scmp.ne.s32.totalorder %s47, %s48
    %p59 = scmp.eq.s32.totalorder %s13, 0
    %p60 = por %p58, %p59
    %p61 = scmp.ne.s32.totalorder %s47, %s48
    %p62 = scmp.eq.s32.totalorder %s14, 1
    %p63 = por %p61, %p62
    %p65 = scmp.ne.s32.totalorder %s48, %s64
    %p66 = scmp.eq.s32.totalorder %s14, 0
    %p67 = por %p65, %p66
    %s68 = ssub.s32 %s8, %s15
    %p69 = scmp.eq.s32.totalorder %s68, 0
    %s71 = sadd.s32 %s70, 1
    %s72 = scalar_select %p69, %s70, %s71
    %p75 = pneg %p69
    %p76 = scmp.eq.s32.totalorder %s8, 1
    %p77 = por %p75, %p76
    %p78 = scmp.ne.s32.totalorder %s70, %s73
    %p79 = scmp.eq.s32.totalorder %s8, 0
    %p80 = por %p78, %p79
    %p81 = scmp.ne.s32.totalorder %s70, %s73
    %p82 = scmp.eq.s32.totalorder %s13, 1
    %p83 = por %p81, %p82
    %p84 = scmp.ne.s32.totalorder %s73, %s74
    %p85 = scmp.eq.s32.totalorder %s13, 0
    %p86 = por %p84, %p85
    %p87 = scmp.ne.s32.totalorder %s73, %s74
    %p88 = scmp.eq.s32.totalorder %s14, 1
    %p89 = por %p87, %p88
    %p91 = scmp.ne.s32.totalorder %s74, %s90
    %p92 = scmp.eq.s32.totalorder %s14, 0
    %p93 = por %p91, %p92
    %p94 = scmp.le.s32.totalorder 1, %s8
    %p95 = scmp.lt.s32.totalorder %s8, 3
    %p96 = pnand %p94, %p95
    %p97 = pneg %p96
    // Predicated region
    $region9: #{visible_stem_forward.3} parent=5 // pred_check
      _
    $region10: #{visible_stem_forward.3} parent=5 // pred_check_branch
      %99 = sbr.rel (%p96) target = $region12
    $region11: #{visible_stem_forward.3} parent=5 // pred_region
      %s100 = ssub.s32 %s8, 1
    $region12: #{visible_stem_forward.3} parent=5 // pred_fallthru
      _
    %p101 = scmp.lt.s32.totalorder %s8, 2
    // Predicated region
    $region13: #{visible_stem_forward.3} parent=5 // pred_check
      %p102 = pneg %p101
    $region14: #{visible_stem_forward.3} parent=5 // pred_check_branch
      %104 = sbr.rel (%p102) target = $region16
    $region15: #{visible_stem_forward.3} parent=5 // pred_region
      // Predicated region
      $region17: #{visible_stem_forward.3} parent=15 // pred_check
        %p105 = pneg %p28
      $region18: #{visible_stem_forward.3} parent=15 // pred_check_branch
        %107 = sbr.rel (%p105) target = $region20
      $region19: #{visible_stem_forward.3} parent=15 // pred_region
        %p108 = scmp.lt.s32.totalorder %s8, 1
        %s109 = scalar_select %p108, %s8, 1
        %s110 = smul.addr %s109, 36
        %s111 = smul.addr %s110, 8
        %s112 = scalar_lea.vmem %s0, %s111
      $region20: #{visible_stem_forward.3} parent=15 // pred_fallthru
        _
      // Predicated region
      $region21: #{visible_stem_forward.3} parent=15 // pred_check
        %p113 = pneg %p54
      $region22: #{visible_stem_forward.3} parent=15 // pred_check_branch
        %115 = sbr.rel (%p113) target = $region24
      $region23: #{visible_stem_forward.3} parent=15 // pred_region
        %p116 = scmp.lt.s32.totalorder %s8, 1
        %s117 = scalar_select %p116, %s8, 1
        %s118 = smul.addr %s117, 36
        %s119 = smul.addr %s118, 8
        %s120 = scalar_lea.vmem %s1, %s119
      $region24: #{visible_stem_forward.3} parent=15 // pred_fallthru
        _
    $region16: #{visible_stem_forward.3} parent=5 // pred_fallthru
      _
    %p121 = scmp.le.s32.totalorder 1, %s8
    %p122 = scmp.lt.s32.totalorder %s8, 3
    %p123 = pnand %p121, %p122
    %p124 = pneg %p123
    // Predicated region
    $region25: #{visible_stem_forward.3} parent=5 // pred_check
      _
    $region26: #{visible_stem_forward.3} parent=5 // pred_check_branch
      %126 = sbr.rel (%p123) target = $region28
    $region27: #{visible_stem_forward.3} parent=5 // pred_region
      %s127 = ssub.s32 %s8, 1
      %p128 = scmp.lt.s32.totalorder %s13, 1
      %s129 = scalar_select %p128, %s13, 1
      %s130 = smul.addr %s129, 36
      %s131 = smul.addr %s130, 8
      %s132 = scalar_lea.vmem %s0, %s131
      %p133 = pneg %p34
      %p134 = pneg %p31
      %p135 = scmp.lt.s32.totalorder %s13, 1
      %s136 = scalar_select %p135, %s13, 1
      %s137 = smul.addr %s136, 36
      %s138 = smul.addr %s137, 8
      %s139 = scalar_lea.vmem %s1, %s138
      %p140 = pneg %p60
      %p141 = pneg %p57
      %p142 = pneg %p86
      %p143 = pneg %p83
      %p144 = scmp.lt.s32.totalorder %s13, 1
      %s145 = scalar_select %p144, %s13, 1
      %s146 = smul.addr %s145, 8
      %s147 = smul.addr %s146, 8
      %s148 = scalar_lea.vmem %s2, %s147
      %p149 = scmp.lt.s32.totalorder %s13, 1
      %s150 = scalar_select %p149, %s13, 1
      %s151 = smul.addr %s150, 36
      %s152 = smul.addr %s151, 8
      %s153 = scalar_lea.vmem %s0, %s152
      %p154 = scmp.lt.s32.totalorder %s13, 1
      %s155 = scalar_select %p154, %s13, 1
      %s156 = smul.addr %s155, 36
      %s157 = smul.addr %s156, 8
      %s158 = scalar_lea.vmem %s1, %s157
      %p159 = scmp.lt.s32.totalorder %s13, 1
      %s160 = scalar_select %p159, %s13, 1
      %s161 = smul.addr %s160, 8
      %s162 = smul.addr %s161, 8
      %s163 = scalar_lea.vmem %s2, %s162
      %v164 = vld [vmem:[%s153] sm:$0xff]
      %v165 = vld [vmem:[%s153 + $0x8] sm:$0x1]
      %v166 = vld [vmem:[%s153 + $0x10] sm:$0xff]
      %v167 = vld [vmem:[%s153 + $0x18] sm:$0x1]
      %v168 = vld [vmem:[%s153 + $0x20] sm:$0xff]
      %v169 = vld [vmem:[%s153 + $0x28] sm:$0x1]
      %v170 = vld [vmem:[%s153 + $0x30] sm:$0xff]
      %v171 = vld [vmem:[%s153 + $0x38] sm:$0x1]
      %v172 = vld [vmem:[%s153 + $0x40] sm:$0xff]
      %v173 = vld [vmem:[%s153 + $0x48] sm:$0x1]
      %v174 = vld [vmem:[%s153 + $0x50] sm:$0xff]
      %v175 = vld [vmem:[%s153 + $0x58] sm:$0x1]
      %v176 = vld [vmem:[%s153 + $0x60] sm:$0xff]
      %v177 = vld [vmem:[%s153 + $0x68] sm:$0x1]
      %v178 = vld [vmem:[%s153 + $0x70] sm:$0xff]
      %v179 = vld [vmem:[%s153 + $0x78] sm:$0x1]
      %v180 = vld [vmem:[%s153 + $0x80] sm:$0xff]
      %v181 = vld [vmem:[%s153 + $0x88] sm:$0x1]
      %v182 = vld [vmem:[%s153 + $0x90] sm:$0xff]
      %v183 = vld [vmem:[%s153 + $0x98] sm:$0x1]
      %v184 = vld [vmem:[%s153 + $0xa0] sm:$0xff]
      %v185 = vld [vmem:[%s153 + $0xa8] sm:$0x1]
      %v186 = vld [vmem:[%s153 + $0xb0] sm:$0xff]
      %v187 = vld [vmem:[%s153 + $0xb8] sm:$0x1]
      %v188 = vld [vmem:[%s153 + $0xc0] sm:$0xff]
      %v189 = vld [vmem:[%s153 + $0xc8] sm:$0x1]
      %v190 = vld [vmem:[%s153 + $0xd0] sm:$0xff]
      %v191 = vld [vmem:[%s153 + $0xd8] sm:$0x1]
      %v192 = vld [vmem:[%s153 + $0xe0] sm:$0xff]
      %v193 = vld [vmem:[%s153 + $0xe8] sm:$0x1]
      %v194 = vld [vmem:[%s153 + $0xf0] sm:$0xff]
      %v195 = vld [vmem:[%s153 + $0xf8] sm:$0x1]
      %v196 = vld [vmem:[%s153 + $0x100] sm:$0xff]
      %v197 = vld [vmem:[%s153 + $0x108] sm:$0x1]
      %v198 = vld [vmem:[%s158] sm:$0xff]
      %v199 = vld [vmem:[%s158 + $0x10] sm:$0xff]
      %v200 = vld [vmem:[%s158 + $0x20] sm:$0xff]
      %v201 = vld [vmem:[%s158 + $0x30] sm:$0xff]
      %v202 = vld [vmem:[%s158 + $0x40] sm:$0xff]
      %v203 = vld [vmem:[%s158 + $0x50] sm:$0xff]
      %v204 = vld [vmem:[%s158 + $0x60] sm:$0xff]
      %v205 = vld [vmem:[%s158 + $0x70] sm:$0xff]
      %v206 = vld [vmem:[%s158 + $0x80] sm:$0xff]
      %v207 = vld [vmem:[%s158 + $0x90] sm:$0xff]
      %v208 = vld [vmem:[%s158 + $0xa0] sm:$0xff]
      %v209 = vld [vmem:[%s158 + $0xb0] sm:$0xff]
      %v210 = vld [vmem:[%s158 + $0xc0] sm:$0xff]
      %v211 = vld [vmem:[%s158 + $0xd0] sm:$0xff]
      %v212 = vld [vmem:[%s158 + $0xe0] sm:$0xff]
      %v213 = vld [vmem:[%s158 + $0xf0] sm:$0xff]
      %v214 = vld [vmem:[%s158 + $0x100] sm:$0xff]
      %v215 = vmax.f32 %v164, %v198
      %v216 = vmax.f32 %v166, %v199
      %v217 = vmax.f32 %v168, %v200
      %v218 = vmax.f32 %v170, %v201
      %v219 = vmax.f32 %v172, %v202
      %v220 = vmax.f32 %v174, %v203
      %v221 = vmax.f32 %v176, %v204
      %v222 = vmax.f32 %v178, %v205
      %v223 = vmax.f32 %v180, %v206
      %v224 = vmax.f32 %v182, %v207
      %v225 = vmax.f32 %v184, %v208
      %v226 = vmax.f32 %v186, %v209
      %v227 = vmax.f32 %v188, %v210
      %v228 = vmax.f32 %v190, %v211
      %v229 = vmax.f32 %v192, %v212
      %v230 = vmax.f32 %v194, %v213
      %v231 = vmax.f32 %v196, %v214
      %vm266 = vcmask 1046528
      %v267 = vrot.slane %v164, 1
      %v268 = vrot.slane %v165, 1
      %v269 = vsel %vm266, %v267, %v268
      %v270 = vrot.slane %v166, 1
      %v271 = vrot.slane %v167, 1
      %v272 = vsel %vm266, %v270, %v271
      %v273 = vrot.slane %v168, 1
      %v274 = vrot.slane %v169, 1
      %v275 = vsel %vm266, %v273, %v274
      %v276 = vrot.slane %v170, 1
      %v277 = vrot.slane %v171, 1
      %v278 = vsel %vm266, %v276, %v277
      %v279 = vrot.slane %v172, 1
      %v280 = vrot.slane %v173, 1
      %v281 = vsel %vm266, %v279, %v280
      %v282 = vrot.slane %v174, 1
      %v283 = vrot.slane %v175, 1
      %v284 = vsel %vm266, %v282, %v283
      %v285 = vrot.slane %v176, 1
      %v286 = vrot.slane %v177, 1
      %v287 = vsel %vm266, %v285, %v286
      %v288 = vrot.slane %v178, 1
      %v289 = vrot.slane %v179, 1
      %v290 = vsel %vm266, %v288, %v289
      %v291 = vrot.slane %v180, 1
      %v292 = vrot.slane %v181, 1
      %v293 = vsel %vm266, %v291, %v292
      %v294 = vrot.slane %v182, 1
      %v295 = vrot.slane %v183, 1
      %v296 = vsel %vm266, %v294, %v295
      %v297 = vrot.slane %v184, 1
      %v298 = vrot.slane %v185, 1
      %v299 = vsel %vm266, %v297, %v298
      %v300 = vrot.slane %v186, 1
      %v301 = vrot.slane %v187, 1
      %v302 = vsel %vm266, %v300, %v301
      %v303 = vrot.slane %v188, 1
      %v304 = vrot.slane %v189, 1
      %v305 = vsel %vm266, %v303, %v304
      %v306 = vrot.slane %v190, 1
      %v307 = vrot.slane %v191, 1
      %v308 = vsel %vm266, %v306, %v307
      %v309 = vrot.slane %v192, 1
      %v310 = vrot.slane %v193, 1
      %v311 = vsel %vm266, %v309, %v310
      %v312 = vrot.slane %v194, 1
      %v313 = vrot.slane %v195, 1
      %v314 = vsel %vm266, %v312, %v313
      %v315 = vrot.slane %v196, 1
      %v316 = vrot.slane %v197, 1
      %v317 = vsel %vm266, %v315, %v316
      %v335 = vmax.f32 %v215, %v269
      %v336 = vmax.f32 %v216, %v272
      %v337 = vmax.f32 %v217, %v275
      %v338 = vmax.f32 %v218, %v278
      %v339 = vmax.f32 %v219, %v281
      %v340 = vmax.f32 %v220, %v284
      %v341 = vmax.f32 %v221, %v287
      %v342 = vmax.f32 %v222, %v290
      %v343 = vmax.f32 %v223, %v293
      %v344 = vmax.f32 %v224, %v296
      %v345 = vmax.f32 %v225, %v299
      %v346 = vmax.f32 %v226, %v302
      %v347 = vmax.f32 %v227, %v305
      %v348 = vmax.f32 %v228, %v308
      %v349 = vmax.f32 %v229, %v311
      %v350 = vmax.f32 %v230, %v314
      %v351 = vmax.f32 %v231, %v317
      %v352 = vmax.f32 %v335, %v336
      %v353 = vmax.f32 %v337, %v338
      %v354 = vmax.f32 %v339, %v340
      %v355 = vmax.f32 %v341, %v342
      %v356 = vmax.f32 %v343, %v344
      %v357 = vmax.f32 %v345, %v346
      %v358 = vmax.f32 %v347, %v348
      %v359 = vmax.f32 %v349, %v350
      %v360 = vmax.f32 %v352, %v337
      %v361 = vmax.f32 %v353, %v339
      %v362 = vmax.f32 %v354, %v341
      %v363 = vmax.f32 %v355, %v343
      %v364 = vmax.f32 %v356, %v345
      %v365 = vmax.f32 %v357, %v347
      %v366 = vmax.f32 %v358, %v349
      %v367 = vmax.f32 %v359, %v351
      %368 = vst [vmem:[%s163] sm:$0xff] %v360
      %369 = vst [vmem:[%s163 + $0x8] sm:$0xff] %v361
      %370 = vst [vmem:[%s163 + $0x10] sm:$0xff] %v362
      %371 = vst [vmem:[%s163 + $0x18] sm:$0xff] %v363
      %372 = vst [vmem:[%s163 + $0x20] sm:$0xff] %v364
      %373 = vst [vmem:[%s163 + $0x28] sm:$0xff] %v365
      %374 = vst [vmem:[%s163 + $0x30] sm:$0xff] %v366
      %375 = vst [vmem:[%s163 + $0x38] sm:$0xff] %v367
      %p376 = scmp.lt.s32.totalorder %s13, 1
      %s377 = scalar_select %p376, %s13, 1
      %s378 = smul.addr %s377, 8
      %s379 = smul.addr %s378, 8
      %s380 = scalar_lea.vmem %s2, %s379
      // Predicated region
      $region29: #{visible_stem_forward.3} parent=27 // pred_check
        %p381 = pneg %p83
      $region30: #{visible_stem_forward.3} parent=27 // pred_check_branch
        %383 = sbr.rel (%p381) target = $region32
      $region31: #{visible_stem_forward.3} parent=27 // pred_region
        _
      $region32: #{visible_stem_forward.3} parent=27 // pred_fallthru
        _
    $region28: #{visible_stem_forward.3} parent=5 // pred_fallthru
      _
    %p384 = scmp.le.s32.totalorder 2, %s8
    // Predicated region
    $region33: #{visible_stem_forward.3} parent=5 // pred_check
      %p385 = pneg %p384
    $region34: #{visible_stem_forward.3} parent=5 // pred_check_branch
      %387 = sbr.rel (%p385) target = $region36
    $region35: #{visible_stem_forward.3} parent=5 // pred_region
      %s388 = ssub.s32 %s8, 2
      // Predicated region
      $region37: #{visible_stem_forward.3} parent=35 // pred_check
        %p389 = pneg %p89
      $region38: #{visible_stem_forward.3} parent=35 // pred_check_branch
        %391 = sbr.rel (%p389) target = $region40
      $region39: #{visible_stem_forward.3} parent=35 // pred_region
        %p392 = scmp.lt.s32.totalorder %s14, 1
        %s393 = scalar_select %p392, %s14, 1
        %s394 = smul.addr %s393, 8
        %s395 = smul.addr %s394, 8
        %s396 = scalar_lea.vmem %s2, %s395
      $region40: #{visible_stem_forward.3} parent=35 // pred_fallthru
        _
    $region36: #{visible_stem_forward.3} parent=5 // pred_fallthru
      _
  $region6: #{visible_stem_forward.3} parent=0 // loop_footer
    %s12 = sadd.s32 1, %s8
  $region7: #{visible_stem_forward.3} parent=0 // loop_footer_branch
    %7 = sbr.rel target = $region3
  $region8: #{visible_stem_forward.3} parent=0 // loop_exit
    _

</llo_original>
